<compile_context>
chip_gen: v7x
topology: tpu7x:2x2x1
jax: 0.10.0
libtpu: 0.0.40
codegen_flags: <defaults>
</compile_context>

<pallas_src>
import functools

import jax
import jax.numpy as jnp
from jax.experimental import pallas as pl
from jax.experimental.pallas import tpu as pltpu


def _round_up(x, m):
    return ((x + m - 1) // m) * m


def _pick_tile(n_pad, target):
    """Largest multiple of 128 that divides n_pad and is <= target."""
    t = max(128, min(target, n_pad))
    t -= t % 128
    while n_pad % t:
        t -= 128
    return t


def gin_layer_kernel(adj_ref, xk_ref, xi_ref, w_ref, b_ref, out_ref, acc_ref,
                     *, apply_relu):
    """One GIN layer (eps=0): out = [relu]( (x + A@x) @ W + b ).

    Grid: (i = destination row block [parallel], k = source/reduction block
    [arbitrary, last]).  acc_ref accumulates the A@x aggregation in f32.
    """
    k = pl.program_id(1)

    @pl.when(k == 0)
    def _():
        acc_ref[...] = jnp.zeros_like(acc_ref)

    # A lives in HBM/VMEM as bf16 (exact small-int edge counts, half the bytes);
    # upcast for the f32 MXU accumulation.
    adj_blk = adj_ref[...].astype(jnp.float32)
    acc_ref[...] += jnp.dot(adj_blk, xk_ref[...],
                            preferred_element_type=jnp.float32)

    @pl.when(k == pl.num_programs(1) - 1)
    def _():
        z = xi_ref[...] + acc_ref[...]          # (1+eps)*x + sum_{j in N(i)} x_j, eps=0
        out = jnp.dot(z, w_ref[...], preferred_element_type=jnp.float32)
        out = out + b_ref[...]                  # bias broadcast (1, H)
        if apply_relu:
            out = jnp.maximum(out, 0.0)
        out_ref[...] = out.astype(out_ref.dtype)


def _gin_layer(adj_bf16, x_feat, w, b, *, apply_relu, tm, tk):
    n_pad = adj_bf16.shape[0]
    f_pad = x_feat.shape[1]
    h_pad = w.shape[1]
    grid = (n_pad // tm, n_pad // tk)

    flops = 2 * n_pad * n_pad * f_pad + 2 * n_pad * f_pad * h_pad
    bytes_accessed = (adj_bf16.size * 2            # bf16 adjacency stream
                      + 2 * x_feat.size * 4        # features read twice (k- and i-blocks)
                      + w.size * 4 + b.size * 4
                      + n_pad * h_pad * 4)         # output write

    return pl.pallas_call(
        functools.partial(gin_layer_kernel, apply_relu=apply_relu),
        out_shape=jax.ShapeDtypeStruct((n_pad, h_pad), jnp.float32),
        grid_spec=pltpu.PrefetchScalarGridSpec(
            num_scalar_prefetch=0,
            grid=grid,
            in_specs=[
                pl.BlockSpec((tm, tk), lambda i, k: (i, k)),        # A[i, k]
                pl.BlockSpec((tk, f_pad), lambda i, k: (k, 0)),     # x[k]  (source rows)
                pl.BlockSpec((tm, f_pad), lambda i, k: (i, 0)),     # x[i]  (self term)
                pl.BlockSpec((f_pad, h_pad), lambda i, k: (0, 0)),  # W
                pl.BlockSpec((1, h_pad), lambda i, k: (0, 0)),      # b
            ],
            out_specs=pl.BlockSpec((tm, h_pad), lambda i, k: (i, 0)),
            scratch_shapes=[pltpu.VMEM((tm, f_pad), jnp.float32)],
        ),
        compiler_params=pltpu.CompilerParams(
            dimension_semantics=("parallel", "arbitrary"),
        ),
        cost_estimate=pl.CostEstimate(
            flops=flops, transcendentals=0, bytes_accessed=bytes_accessed),
    )(adj_bf16, x_feat, x_feat, w, b)


def my_gnn_forward(x, edge_index, params):
    """x: (N, F) float32, edge_index: (2, E) int32, params: dict w1,b1,w2,b2."""
    n, f = x.shape
    w1, b1, w2, b2 = params["w1"], params["b1"], params["w2"], params["b2"]
    h = w1.shape[1]
    c = w2.shape[1]

    # Pad node count to a multiple of 128 and pick A-tile sizes (tiles stay small
    # enough for v7x's 64 MiB VMEM with double buffering; row axis is 'parallel').
    n_pad = _round_up(n, 128)
    tm = _pick_tile(n_pad, 256)
    tk = _pick_tile(n_pad, 512)

    # Pad feature dims to multiples of 128 -> lane-dense MXU/matmul + lane-dense
    # output stores (the real C=2 output is sliced out below).
    f_pad = _round_up(f, 128)
    h_pad = _round_up(h, 128)
    c_pad = _round_up(c, 128)

    # Densify the graph once (scatter-add is data-dependent glue, done in plain
    # JAX), directly at padded size, then store as bf16 (edge counts are exact).
    src, dst = edge_index[0], edge_index[1]
    adj = (jnp.zeros((n_pad, n_pad), jnp.float32)
           .at[dst, src].add(1.0)
           .astype(jnp.bfloat16))

    x_p = jnp.zeros((n_pad, f_pad), jnp.float32).at[:n, :f].set(x)
    w1_p = jnp.zeros((f_pad, h_pad), jnp.float32).at[:f, :h].set(w1)
    b1_p = jnp.zeros((1, h_pad), jnp.float32).at[:, :h].set(b1)
    w2_p = jnp.zeros((h_pad, c_pad), jnp.float32).at[:h, :c].set(w2)
    b2_p = jnp.zeros((1, c_pad), jnp.float32).at[:, :c].set(b2)

    # Two tiled passes over A: padded rows/cols of A are zero, so padded nodes
    # never contribute to real nodes; padded outputs are sliced off at the end.
    h1 = _gin_layer(adj, x_p, w1_p, b1_p, apply_relu=True, tm=tm, tk=tk)
    out = _gin_layer(adj, h1, w2_p, b2_p, apply_relu=False, tm=tm, tk=tk)
    return out[:n, :c]


def init_params(key, input_feat, hidden_channels, classes=2):
    """torch.nn.Linear-style init: U(-1/sqrt(fan_in), 1/sqrt(fan_in))."""
    k1, k2, k3, k4 = jax.random.split(key, 4)
    bound1 = 1.0 / (input_feat ** 0.5)
    bound2 = 1.0 / (hidden_channels ** 0.5)
    return {
        "w1": jax.random.uniform(k1, (input_feat, hidden_channels), jnp.float32,
                                 -bound1, bound1),
        "b1": jax.random.uniform(k2, (1, hidden_channels), jnp.float32,
                                 -bound1, bound1),
        "w2": jax.random.uniform(k3, (hidden_channels, classes), jnp.float32,
                                 -bound2, bound2),
        "b2": jax.random.uniform(k4, (1, classes), jnp.float32,
                                 -bound2, bound2),
    }


if __name__ == "__main__":
    key = jax.random.PRNGKey(0)
    kx, kp = jax.random.split(key)

    N = 16            # nodes
    F = 8             # input_feat
    H = 32            # hidden_channels
    C = 2             # classes

    x = jax.random.normal(kx, (N, F), dtype=jnp.float32)

    # Small deterministic graph: bidirectional ring over N nodes.
    src = jnp.arange(N, dtype=jnp.int32)
    dst = (src + 1) % N
    edge_index = jnp.stack(
        [jnp.concatenate([src, dst]), jnp.concatenate([dst, src])], axis=0
    )  # (2, 2N)

    params = init_params(kp, F, H, C)

    out = my_gnn_forward(x, edge_index, params)
    out = jax.block_until_ready(out)

    # Pure-JAX reference check (same math, outside Pallas).
    adj = jnp.zeros((N, N), jnp.float32).at[edge_index[1], edge_index[0]].add(1.0)
    h_ref = jnp.maximum((x + adj @ x) @ params["w1"] + params["b1"], 0.0)
    ref = (h_ref + adj @ h_ref) @ params["w2"] + params["b2"]
    assert out.shape == (N, C)
    assert jnp.allclose(out, ref, atol=1e-3, rtol=1e-3), (
        float(jnp.max(jnp.abs(out - ref))))

    print("KERNEL_OK")
</pallas_src>

<mosaic_0001>
module attributes {stable_mosaic.version = 11 : i64} {
  func.func @gin_layer_kernel(%arg0: i32, %arg1: i32, %arg2: memref<128x128xbf16, #tpu.memory_space<vmem>>, %arg3: memref<128x128xf32, #tpu.memory_space<vmem>>, %arg4: memref<128x128xf32, #tpu.memory_space<vmem>>, %arg5: memref<128x128xf32, #tpu.memory_space<vmem>>, %arg6: memref<1x128xf32, #tpu.memory_space<vmem>>, %arg7: memref<128x128xf32, #tpu.memory_space<vmem>>, %arg8: memref<128x128xf32, #tpu.memory_space<vmem>>) attributes {dimension_semantics = [#tpu.dimension_semantics<parallel>, #tpu.dimension_semantics<arbitrary>], iteration_bounds = array<i64: 1, 1>, scalar_prefetch = 0 : i64, scratch_operands = 1 : i64, tpu.core_type = #tpu.core_type<tc>, window_params = [{transform_indices = @transform_0, window_bounds = array<i64: 128, 128>}, {transform_indices = @transform_1, window_bounds = array<i64: 128, 128>}, {transform_indices = @transform_2, window_bounds = array<i64: 128, 128>}, {pipeline_mode = #tpu.pipeline_mode<synchronous>, transform_indices = @transform_3, window_bounds = array<i64: 128, 128>}, {pipeline_mode = #tpu.pipeline_mode<synchronous>, transform_indices = @transform_4, window_bounds = array<i64: 1, 128>}, {transform_indices = @transform_5, window_bounds = array<i64: 128, 128>}]} {
    %c0_i32 = arith.constant 0 : i32
    %0 = arith.cmpi eq, %arg1, %c0_i32 : i32
    %1 = arith.extui %0 : i1 to i32
    %c0_i32_0 = arith.constant 0 : i32
    %2 = arith.cmpi ne, %1, %c0_i32_0 : i32
    scf.if %2 {
      %cst_10 = arith.constant 0.000000e+00 : f32
      %13 = vector.broadcast %cst_10 : f32 to vector<128x128xf32>
      %c0_11 = arith.constant 0 : index
      %c0_12 = arith.constant 0 : index
      %14 = vector.load %arg8[%c0_11, %c0_12] : memref<128x128xf32, #tpu.memory_space<vmem>>, vector<128x128xf32>
      tpu.vector_store %arg8[%c0_11, %c0_12], %13 {strides = array<i32>} : memref<128x128xf32, #tpu.memory_space<vmem>>, vector<128x128xf32>,
    } else {
    }
    %c0 = arith.constant 0 : index
    %c0_1 = arith.constant 0 : index
    %3 = vector.load %arg2[%c0, %c0_1] : memref<128x128xbf16, #tpu.memory_space<vmem>>, vector<128x128xbf16>
    %4 = arith.extf %3 : vector<128x128xbf16> to vector<128x128xf32>
    %c0_2 = arith.constant 0 : index
    %c0_3 = arith.constant 0 : index
    %5 = vector.load %arg8[%c0_2, %c0_3] : memref<128x128xf32, #tpu.memory_space<vmem>>, vector<128x128xf32>
    %c0_4 = arith.constant 0 : index
    %c0_5 = arith.constant 0 : index
    %6 = vector.load %arg3[%c0_4, %c0_5] : memref<128x128xf32, #tpu.memory_space<vmem>>, vector<128x128xf32>
    %cst = arith.constant dense<0.000000e+00> : vector<128x128xf32>
    %7 = tpu.matmul %4, %6, %cst {dimension_numbers = #tpu.dot_dimension_numbers<[1], [0], [0], [1], [0, 0, 1, 1], [], []>} : vector<128x128xf32>, vector<128x128xf32>, vector<128x128xf32> -> vector<128x128xf32>
    %8 = arith.addf %5, %7 : vector<128x128xf32>
    %c0_6 = arith.constant 0 : index
    %c0_7 = arith.constant 0 : index
    %9 = vector.load %arg8[%c0_6, %c0_7] : memref<128x128xf32, #tpu.memory_space<vmem>>, vector<128x128xf32>
    tpu.vector_store %arg8[%c0_6, %c0_7], %8 {strides = array<i32>} : memref<128x128xf32, #tpu.memory_space<vmem>>, vector<128x128xf32>,
    %c0_i32_8 = arith.constant 0 : i32
    %10 = arith.cmpi eq, %arg1, %c0_i32_8 : i32
    %11 = arith.extui %10 : i1 to i32
    %c0_i32_9 = arith.constant 0 : i32
    %12 = arith.cmpi ne, %11, %c0_i32_9 : i32
    scf.if %12 {
      %c0_10 = arith.constant 0 : index
      %c0_11 = arith.constant 0 : index
      %13 = vector.load %arg4[%c0_10, %c0_11] : memref<128x128xf32, #tpu.memory_space<vmem>>, vector<128x128xf32>
      %c0_12 = arith.constant 0 : index
      %c0_13 = arith.constant 0 : index
      %14 = vector.load %arg8[%c0_12, %c0_13] : memref<128x128xf32, #tpu.memory_space<vmem>>, vector<128x128xf32>
      %15 = arith.addf %13, %14 : vector<128x128xf32>
      %c0_14 = arith.constant 0 : index
      %c0_15 = arith.constant 0 : index
      %16 = vector.load %arg5[%c0_14, %c0_15] : memref<128x128xf32, #tpu.memory_space<vmem>>, vector<128x128xf32>
      %cst_16 = arith.constant dense<0.000000e+00> : vector<128x128xf32>
      %17 = tpu.matmul %15, %16, %cst_16 {dimension_numbers = #tpu.dot_dimension_numbers<[1], [0], [0], [1], [0, 0, 1, 1], [], []>} : vector<128x128xf32>, vector<128x128xf32>, vector<128x128xf32> -> vector<128x128xf32>
      %c0_17 = arith.constant 0 : index
      %c0_18 = arith.constant 0 : index
      %18 = vector.load %arg6[%c0_17, %c0_18] : memref<1x128xf32, #tpu.memory_space<vmem>>, vector<1x128xf32>
      %19 = vector.broadcast %18 : vector<1x128xf32> to vector<128x128xf32>
      %20 = arith.addf %17, %19 : vector<128x128xf32>
      %cst_19 = arith.constant 0.000000e+00 : f32
      %21 = vector.broadcast %cst_19 : f32 to vector<128x128xf32>
      %22 = arith.maximumf %20, %21 : vector<128x128xf32>
      %c0_20 = arith.constant 0 : index
      %c0_21 = arith.constant 0 : index
      %23 = vector.load %arg7[%c0_20, %c0_21] : memref<128x128xf32, #tpu.memory_space<vmem>>, vector<128x128xf32>
      tpu.vector_store %arg7[%c0_20, %c0_21], %22 {strides = array<i32>} : memref<128x128xf32, #tpu.memory_space<vmem>>, vector<128x128xf32>,
    } else {
    }
    return
  }
  func.func @transform_0(%arg0: i32, %arg1: i32) -> (i32, i32) {
    %c0_i32 = arith.constant 0 : i32
    return %arg0, %arg1 : i32, i32
  }
  func.func @transform_1(%arg0: i32, %arg1: i32) -> (i32, i32) {
    %c0_i32 = arith.constant 0 : i32
    %c0_i32_0 = arith.constant 0 : i32
    return %arg1, %c0_i32 : i32, i32
  }
  func.func @transform_2(%arg0: i32, %arg1: i32) -> (i32, i32) {
    %c0_i32 = arith.constant 0 : i32
    %c0_i32_0 = arith.constant 0 : i32
    return %arg0, %c0_i32 : i32, i32
  }
  func.func @transform_3(%arg0: i32, %arg1: i32) -> (i32, i32) {
    %c0_i32 = arith.constant 0 : i32
    %c0_i32_0 = arith.constant 0 : i32
    %c0_i32_1 = arith.constant 0 : i32
    return %c0_i32, %c0_i32_0 : i32, i32
  }
  func.func @transform_4(%arg0: i32, %arg1: i32) -> (i32, i32) {
    %c0_i32 = arith.constant 0 : i32
    %c0_i32_0 = arith.constant 0 : i32
    %c0_i32_1 = arith.constant 0 : i32
    return %c0_i32, %c0_i32_0 : i32, i32
  }
  func.func @transform_5(%arg0: i32, %arg1: i32) -> (i32, i32) {
    %c0_i32 = arith.constant 0 : i32
    %c0_i32_0 = arith.constant 0 : i32
    return %arg0, %c0_i32 : i32, i32
  }
}

</mosaic_0001>

<llo_original>
// kernel: tpu_custom_call.1
$region0: #{tpu_custom_call.1}
  #allocation0 [shape = 'u32[]', space=smem, size = 0x4, offset = 0x4, fixed_abs, tag = 'smem constant byte address 0x4 - core index']
  #allocation1 [shape = 'u32[144,128]{1,0:T(1,128)}', space=vmem, size = 0x12000, scoped, tag = 'internal scratch']
  #allocation2 [shape = 'f32[128,128]{1,0:T(8,128)}', space=vmem, size = 0x10000, scoped, tag = 'scratch operand']
  %s0 = inlined_call_operand.hbm [shape: bf16[128,128], index: 0, kind: input, shape index: {}]
  %s1 = inlined_call_operand.hbm [shape: f32[128,128], index: 1, kind: input, shape index: {}]
  %s2 = inlined_call_operand.hbm [shape: f32[128,128], index: 2, kind: input, shape index: {}]
  %s3 = inlined_call_operand.hbm [shape: f32[128,128], index: 3, kind: input, shape index: {}]
  %s4 = inlined_call_operand.vmem [shape: f32[1,128], index: 4, kind: input, shape index: {}]
  %s5 = inlined_call_operand.hbm [shape: f32[128,128], index: 5, kind: output, shape index: {}]
  %s6 = sld [smem:[#allocation0]]
  $region54: #{tpu_custom_call.1} parent=0
    _
  %s8 = ssub.s32 1, %s6
  %s9 = scalar_select 0, %s8, %s6
  $region1: #{tpu_custom_call.1} parent=0
    #allocation3 [shape = 'u8[32768]{0}', space=vmem, size = 0x8000, scoped, tag = 'input window, operand 0, single buffered']
    #allocation4 [shape = 's32[1]{0}', space=sflag, size = 0x4, scoped, tag = 'scoped memory for tpu_custom_call.1']
    #allocation5 [shape = 's32[1]{0}', space=sflag, size = 0x4, scoped, tag = 'scoped memory for tpu_custom_call.1']
    #allocation6 [shape = 'u8[65536]{0}', space=vmem, size = 0x10000, scoped, tag = 'input window, operand 1, single buffered']
    #allocation7 [shape = 's32[1]{0}', space=sflag, size = 0x4, scoped, tag = 'scoped memory for tpu_custom_call.1']
    #allocation8 [shape = 'u8[65536]{0}', space=vmem, size = 0x10000, scoped, tag = 'input window, operand 2, single buffered']
    #allocation9 [shape = 'u8[65536]{0}', space=vmem, size = 0x10000, scoped, tag = 'input window, operand 3, single buffered']
    #allocation10 [shape = 's32[1]{0}', space=sflag, size = 0x4, scoped, tag = 'scoped memory for tpu_custom_call.1']
    #allocation11 [shape = 'u8[65536]{0}', space=vmem, size = 0x10000, scoped, tag = 'output window, operand 0, single buffered']
    %10 = vsyncpa [#allocation4], 0
    %11 = vsyncpa [#allocation7], 0
    %12 = vsyncpa [#allocation10], 0
    %13 = vsyncpa [#allocation5], 0
    // Predicated region
    $region2: #{tpu_custom_call.1} parent=1 // pred_check
      _
    $region3: #{tpu_custom_call.1} parent=1 // pred_check_branch
      %15 = sbr.rel (0) target = $region5
    $region4: #{tpu_custom_call.1} parent=1 // pred_region
      %s17 = ssub.s32 1024, 1024
      %18 = vsyncadd [#allocation4], %s17
      %s19 = sshll.u32 [#allocation3], 4
      %s20 = int_to_ptr.vmem [resolvable:$true] %s19
      %25 = dma.hbm_to_vmem [thread:$0]  %s0, 1024, %s20, [#allocation4], 64, 64, 4
    $region5: #{tpu_custom_call.1} parent=1 // pred_fallthru
      _
    // Predicated region
    $region6: #{tpu_custom_call.1} parent=1 // pred_check
      _
    $region7: #{tpu_custom_call.1} parent=1 // pred_check_branch
      %27 = sbr.rel (0) target = $region9
    $region8: #{tpu_custom_call.1} parent=1 // pred_region
      %s29 = ssub.s32 2048, 2048
      %30 = vsyncadd [#allocation7], %s29
      %s31 = sshll.u32 [#allocation6], 4
      %s32 = int_to_ptr.vmem [resolvable:$true] %s31
      %37 = dma.hbm_to_vmem [thread:$0]  %s1, 2048, %s32, [#allocation7], 128, 128, 8
    $region9: #{tpu_custom_call.1} parent=1 // pred_fallthru
      _
    // Predicated region
    $region10: #{tpu_custom_call.1} parent=1 // pred_check
      _
    $region11: #{tpu_custom_call.1} parent=1 // pred_check_branch
      %39 = sbr.rel (0) target = $region13
    $region12: #{tpu_custom_call.1} parent=1 // pred_region
      %s41 = ssub.s32 2048, 2048
      %42 = vsyncadd [#allocation7], %s41
      %s43 = sshll.u32 [#allocation8], 4
      %s44 = int_to_ptr.vmem [resolvable:$true] %s43
      %49 = dma.hbm_to_vmem [thread:$0]  %s2, 2048, %s44, [#allocation7], 128, 128, 8
    $region13: #{tpu_custom_call.1} parent=1 // pred_fallthru
      _
    // Predicated region
    $region14: #{tpu_custom_call.1} parent=1 // pred_check
      _
    $region15: #{tpu_custom_call.1} parent=1 // pred_check_branch
      %51 = sbr.rel (0) target = $region17
    $region16: #{tpu_custom_call.1} parent=1 // pred_region
      %s53 = ssub.s32 2048, 2048
      %54 = vsyncadd [#allocation10], %s53
      %s55 = sshll.u32 [#allocation9], 4
      %s56 = int_to_ptr.vmem [resolvable:$true] %s55
      %61 = dma.hbm_to_vmem [thread:$0]  %s3, 2048, %s56, [#allocation10], 128, 128, 8
    $region17: #{tpu_custom_call.1} parent=1 // pred_fallthru
      _
    // Predicated region
    $region18: #{tpu_custom_call.1} parent=1 // pred_check
      _
    $region19: #{tpu_custom_call.1} parent=1 // pred_check_branch
      %63 = sbr.rel (0) target = $region21
    $region20: #{tpu_custom_call.1} parent=1 // pred_region
      _
    $region21: #{tpu_custom_call.1} parent=1 // pred_fallthru
      _
    // Predicated region
    $region22: #{tpu_custom_call.1} parent=1 // pred_check
      _
    $region23: #{tpu_custom_call.1} parent=1 // pred_check_branch
      %65 = sbr.rel (0) target = $region25
    $region24: #{tpu_custom_call.1} parent=1 // pred_region
      %66 = dma.done [#allocation4], 1024
    $region25: #{tpu_custom_call.1} parent=1 // pred_fallthru
      _
    // Predicated region
    $region26: #{tpu_custom_call.1} parent=1 // pred_check
      _
    $region27: #{tpu_custom_call.1} parent=1 // pred_check_branch
      %68 = sbr.rel (0) target = $region29
    $region28: #{tpu_custom_call.1} parent=1 // pred_region
      %69 = dma.done [#allocation7], 2048
    $region29: #{tpu_custom_call.1} parent=1 // pred_fallthru
      _
    // Predicated region
    $region30: #{tpu_custom_call.1} parent=1 // pred_check
      _
    $region31: #{tpu_custom_call.1} parent=1 // pred_check_branch
      %71 = sbr.rel (0) target = $region33
    $region32: #{tpu_custom_call.1} parent=1 // pred_region
      %72 = dma.done [#allocation7], 2048
    $region33: #{tpu_custom_call.1} parent=1 // pred_fallthru
      _
    // Predicated region
    $region34: #{tpu_custom_call.1} parent=1 // pred_check
      _
    $region35: #{tpu_custom_call.1} parent=1 // pred_check_branch
      %74 = sbr.rel (0) target = $region37
    $region36: #{tpu_custom_call.1} parent=1 // pred_region
      %75 = dma.done [#allocation10], 2048
    $region37: #{tpu_custom_call.1} parent=1 // pred_fallthru
      _
    %p76 = scmp.eq.s32.totalorder 0, 0
    // Predicated region
    $region38: #{tpu_custom_call.1} parent=1 // pred_check
      %p77 = pneg %p76
    $region39: #{tpu_custom_call.1} parent=1 // pred_check_branch
      %79 = sbr.rel (%p77) target = $region41
    $region40: #{tpu_custom_call.1} parent=1 // pred_region
      %80 = vst [vmem:[#allocation2] sm:$0xff] 0.0
      %81 = vst [vmem:[#allocation2 + $0x8] sm:$0xff] 0.0
      %82 = vst [vmem:[#allocation2 + $0x10] sm:$0xff] 0.0
      %83 = vst [vmem:[#allocation2 + $0x18] sm:$0xff] 0.0
      %84 = vst [vmem:[#allocation2 + $0x20] sm:$0xff] 0.0
      %85 = vst [vmem:[#allocation2 + $0x28] sm:$0xff] 0.0
      %86 = vst [vmem:[#allocation2 + $0x30] sm:$0xff] 0.0
      %87 = vst [vmem:[#allocation2 + $0x38] sm:$0xff] 0.0
      %88 = vst [vmem:[#allocation2 + $0x40] sm:$0xff] 0.0
      %89 = vst [vmem:[#allocation2 + $0x48] sm:$0xff] 0.0
      %90 = vst [vmem:[#allocation2 + $0x50] sm:$0xff] 0.0
      %91 = vst [vmem:[#allocation2 + $0x58] sm:$0xff] 0.0
      %92 = vst [vmem:[#allocation2 + $0x60] sm:$0xff] 0.0
      %93 = vst [vmem:[#allocation2 + $0x68] sm:$0xff] 0.0
      %94 = vst [vmem:[#allocation2 + $0x70] sm:$0xff] 0.0
      %95 = vst [vmem:[#allocation2 + $0x78] sm:$0xff] 0.0
    $region41: #{tpu_custom_call.1} parent=1 // pred_fallthru
      _
    %v96 = vld [vmem:[#allocation3] sm:$0xf]
    %v97 = vld [vmem:[#allocation3 + $0x4] sm:$0xf]
    %v98 = vld [vmem:[#allocation3 + $0x8] sm:$0xf]
    %v99 = vld [vmem:[#allocation3 + $0xc] sm:$0xf]
    %v100 = vld [vmem:[#allocation3 + $0x10] sm:$0xf]
    %v101 = vld [vmem:[#allocation3 + $0x14] sm:$0xf]
    %v102 = vld [vmem:[#allocation3 + $0x18] sm:$0xf]
    %v103 = vld [vmem:[#allocation3 + $0x1c] sm:$0xf]
    %v104 = vld [vmem:[#allocation3 + $0x20] sm:$0xf]
    %v105 = vld [vmem:[#allocation3 + $0x24] sm:$0xf]
    %v106 = vld [vmem:[#allocation3 + $0x28] sm:$0xf]
    %v107 = vld [vmem:[#allocation3 + $0x2c] sm:$0xf]
    %v108 = vld [vmem:[#allocation3 + $0x30] sm:$0xf]
    %v109 = vld [vmem:[#allocation3 + $0x34] sm:$0xf]
    %v110 = vld [vmem:[#allocation3 + $0x38] sm:$0xf]
    %v111 = vld [vmem:[#allocation3 + $0x3c] sm:$0xf]
    %v112 = vunpack.c.l.bf16 %v96
    %v113 = vunpack.c.l.bf16 %v97
    %v114 = vunpack.c.l.bf16 %v98
    %v115 = vunpack.c.l.bf16 %v99
    %v116 = vunpack.c.l.bf16 %v100
    %v117 = vunpack.c.l.bf16 %v101
    %v118 = vunpack.c.l.bf16 %v102
    %v119 = vunpack.c.l.bf16 %v103
    %v120 = vunpack.c.l.bf16 %v104
    %v121 = vunpack.c.l.bf16 %v105
    %v122 = vunpack.c.l.bf16 %v106
    %v123 = vunpack.c.l.bf16 %v107
    %v124 = vunpack.c.l.bf16 %v108
    %v125 = vunpack.c.l.bf16 %v109
    %v126 = vunpack.c.l.bf16 %v110
    %v127 = vunpack.c.l.bf16 %v111
    %v128 = vld [vmem:[#allocation2] sm:$0xff]
    %v129 = vld [vmem:[#allocation2 + $0x8] sm:$0xff]
    %v130 = vld [vmem:[#allocation2 + $0x10] sm:$0xff]
    %v131 = vld [vmem:[#allocation2 + $0x18] sm:$0xff]
    %v132 = vld [vmem:[#allocation2 + $0x20] sm:$0xff]
    %v133 = vld [vmem:[#allocation2 + $0x28] sm:$0xff]
    %v134 = vld [vmem:[#allocation2 + $0x30] sm:$0xff]
    %v135 = vld [vmem:[#allocation2 + $0x38] sm:$0xff]
    %v136 = vld [vmem:[#allocation2 + $0x40] sm:$0xff]
    %v137 = vld [vmem:[#allocation2 + $0x48] sm:$0xff]
    %v138 = vld [vmem:[#allocation2 + $0x50] sm:$0xff]
    %v139 = vld [vmem:[#allocation2 + $0x58] sm:$0xff]
    %v140 = vld [vmem:[#allocation2 + $0x60] sm:$0xff]
    %v141 = vld [vmem:[#allocation2 + $0x68] sm:$0xff]
    %v142 = vld [vmem:[#allocation2 + $0x70] sm:$0xff]
    %v143 = vld [vmem:[#allocation2 + $0x78] sm:$0xff]
    %v144 = vld [vmem:[#allocation6] sm:$0xff]
    %v145 = vld [vmem:[#allocation6 + $0x8] sm:$0xff]
    %v146 = vld [vmem:[#allocation6 + $0x10] sm:$0xff]
    %v147 = vld [vmem:[#allocation6 + $0x18] sm:$0xff]
    %v148 = vld [vmem:[#allocation6 + $0x20] sm:$0xff]
    %v149 = vld [vmem:[#allocation6 + $0x28] sm:$0xff]
    %v150 = vld [vmem:[#allocation6 + $0x30] sm:$0xff]
    %v151 = vld [vmem:[#allocation6 + $0x38] sm:$0xff]
    %v152 = vld [vmem:[#allocation6 + $0x40] sm:$0xff]
    %v153 = vld [vmem:[#allocation6 + $0x48] sm:$0xff]
    %v154 = vld [vmem:[#allocation6 + $0x50] sm:$0xff]
    %v155 = vld [vmem:[#allocation6 + $0x58] sm:$0xff]
    %v156 = vld [vmem:[#allocation6 + $0x60] sm:$0xff]
    %v157 = vld [vmem:[#allocation6 + $0x68] sm:$0xff]
    %v158 = vld [vmem:[#allocation6 + $0x70] sm:$0xff]
    %v159 = vld [vmem:[#allocation6 + $0x78] sm:$0xff]
    %160 = vmatprep.subr.mxu0 0.0
    %161 = vmatpush1.msra.mxu0 %v144
    %162 = vmatprep.subr.mxu0 0.0
    %163 = vmatpush1.msra.mxu0 %v145
    %164 = vmatprep.subr.mxu0 0.0
    %165 = vmatpush1.msra.mxu0 %v146
    %166 = vmatprep.subr.mxu0 0.0
    %167 = vmatpush1.msra.mxu0 %v147
    %168 = vmatprep.subr.mxu0 0.0
    %169 = vmatpush1.msra.mxu0 %v148
    %170 = vmatprep.subr.mxu0 0.0
    %171 = vmatpush1.msra.mxu0 %v149
    %172 = vmatprep.subr.mxu0 0.0
    %173 = vmatpush1.msra.mxu0 %v150
    %174 = vmatprep.subr.mxu0 0.0
    %175 = vmatpush1.msra.mxu0 %v151
    %176 = vmatprep.subr.mxu0 0.0
    %177 = vmatpush1.msra.mxu0 %v152
    %178 = vmatprep.subr.mxu0 0.0
    %179 = vmatpush1.msra.mxu0 %v153
    %180 = vmatprep.subr.mxu0 0.0
    %181 = vmatpush1.msra.mxu0 %v154
    %182 = vmatprep.subr.mxu0 0.0
    %183 = vmatpush1.msra.mxu0 %v155
    %184 = vmatprep.subr.mxu0 0.0
    %185 = vmatpush1.msra.mxu0 %v156
    %186 = vmatprep.subr.mxu0 0.0
    %187 = vmatpush1.msra.mxu0 %v157
    %188 = vmatprep.subr.mxu0 0.0
    %189 = vmatpush1.msra.mxu0 %v158
    %190 = vmatprep.subr.mxu0 0.0
    %191 = vmatpush1.msra.mxu0 %v159
    %192 = vmatprep.subr.mxu0 0.0
    %193 = vmatpush1.msra.mxu0 0.0
    %194 = vmatprep.subr.mxu0 0.0
    %195 = vmatpush1.msra.mxu0 0.0
    %196 = vmatprep.subr.mxu0 0.0
    %197 = vmatpush1.msra.mxu0 0.0
    %198 = vmatprep.subr.mxu0 0.0
    %199 = vmatpush1.msra.mxu0 0.0
    %200 = vmatprep.subr.mxu0 0.0
    %201 = vmatpush1.msra.mxu0 0.0
    %202 = vmatprep.subr.mxu0 0.0
    %203 = vmatpush1.msra.mxu0 0.0
    %204 = vmatprep.subr.mxu0 0.0
    %205 = vmatpush1.msra.mxu0 0.0
    %206 = vmatprep.subr.mxu0 0.0
    %207 = vmatpush1.msra.mxu0 0.0
    %208 = vmatprep.subr.mxu0 0.0
    %209 = vmatpush1.msra.mxu0 0.0
    %210 = vmatprep.subr.mxu0 0.0
    %211 = vmatpush1.msra.mxu0 0.0
    %212 = vmatprep.subr.mxu0 0.0
    %213 = vmatpush1.msra.mxu0 0.0
    %214 = vmatprep.subr.mxu0 0.0
    %215 = vmatpush1.msra.mxu0 0.0
    %216 = vmatprep.subr.mxu0 0.0
    %217 = vmatpush1.msra.mxu0 0.0
    %218 = vmatprep.subr.mxu0 0.0
    %219 = vmatpush1.msra.mxu0 0.0
    %220 = vmatprep.subr.mxu0 0.0
    %221 = vmatpush1.msra.mxu0 0.0
    %222 = vmatprep.subr.mxu0 0.0
    %223 = vmatpush1.msra.mxu0 0.0
    %224 = vmatprep.mubr.f32.mxu0 0.0
    %225 = vmatmul.mubr.f32.gmra.mrb[0].mxu0 %v112
    %v226 = vpop.f32.mrb[0].mxu0
    %v227 = vadd.f32 0.0, %v226
    %v228 = vpop.f32.mrb[0].mxu0
    %229 = vmatprep.mubr.f32.mxu0 0.0
    %230 = vmatmul.mubr.f32.gmra.mrb[0].mxu0 %v113
    %v231 = vpop.f32.mrb[0].mxu0
    %v232 = vadd.f32 0.0, %v231
    %v233 = vpop.f32.mrb[0].mxu0
    %234 = vmatprep.mubr.f32.mxu0 0.0
    %235 = vmatmul.mubr.f32.gmra.mrb[0].mxu0 %v114
    %v236 = vpop.f32.mrb[0].mxu0
    %v237 = vadd.f32 0.0, %v236
    %v238 = vpop.f32.mrb[0].mxu0
    %239 = vmatprep.mubr.f32.mxu0 0.0
    %240 = vmatmul.mubr.f32.gmra.mrb[0].mxu0 %v115
    %v241 = vpop.f32.mrb[0].mxu0
    %v242 = vadd.f32 0.0, %v241
    %v243 = vpop.f32.mrb[0].mxu0
    %244 = vmatprep.mubr.f32.mxu0 0.0
    %245 = vmatmul.mubr.f32.gmra.mrb[0].mxu0 %v116
    %v246 = vpop.f32.mrb[0].mxu0
    %v247 = vadd.f32 0.0, %v246
    %v248 = vpop.f32.mrb[0].mxu0
    %249 = vmatprep.mubr.f32.mxu0 0.0
    %250 = vmatmul.mubr.f32.gmra.mrb[0].mxu0 %v117
    %v251 = vpop.f32.mrb[0].mxu0
    %v252 = vadd.f32 0.0, %v251
    %v253 = vpop.f32.mrb[0].mxu0
    %254 = vmatprep.mubr.f32.mxu0 0.0
    %255 = vmatmul.mubr.f32.gmra.mrb[0].mxu0 %v118
    %v256 = vpop.f32.mrb[0].mxu0
    %v257 = vadd.f32 0.0, %v256
    %v258 = vpop.f32.mrb[0].mxu0
    %259 = vmatprep.mubr.f32.mxu0 0.0
    %260 = vmatmul.mubr.f32.gmra.mrb[0].mxu0 %v119
    %v261 = vpop.f32.mrb[0].mxu0
    %v262 = vadd.f32 0.0, %v261
    %v263 = vpop.f32.mrb[0].mxu0
    %264 = vmatprep.mubr.f32.mxu0 0.0
    %265 = vmatmul.mubr.f32.gmra.mrb[0].mxu0 %v120
    %v266 = vpop.f32.mrb[0].mxu0
    %v267 = vadd.f32 0.0, %v266
    %v268 = vpop.f32.mrb[0].mxu0
    %269 = vmatprep.mubr.f32.mxu0 0.0
    %270 = vmatmul.mubr.f32.gmra.mrb[0].mxu0 %v121
    %v271 = vpop.f32.mrb[0].mxu0
    %v272 = vadd.f32 0.0, %v271
    %v273 = vpop.f32.mrb[0].mxu0
    %274 = vmatprep.mubr.f32.mxu0 0.0
    %275 = vmatmul.mubr.f32.gmra.mrb[0].mxu0 %v122
    %v276 = vpop.f32.mrb[0].mxu0
    %v277 = vadd.f32 0.0, %v276
    %v278 = vpop.f32.mrb[0].mxu0
    %279 = vmatprep.mubr.f32.mxu0 0.0
    %280 = vmatmul.mubr.f32.gmra.mrb[0].mxu0 %v123
    %v281 = vpop.f32.mrb[0].mxu0
    %v282 = vadd.f32 0.0, %v281
    %v283 = vpop.f32.mrb[0].mxu0
    %284 = vmatprep.mubr.f32.mxu0 0.0
    %285 = vmatmul.mubr.f32.gmra.mrb[0].mxu0 %v124
    %v286 = vpop.f32.mrb[0].mxu0
    %v287 = vadd.f32 0.0, %v286
    %v288 = vpop.f32.mrb[0].mxu0
    %289 = vmatprep.mubr.f32.mxu0 0.0
    %290 = vmatmul.mubr.f32.gmra.mrb[0].mxu0 %v125
    %v291 = vpop.f32.mrb[0].mxu0
    %v292 = vadd.f32 0.0, %v291
    %v293 = vpop.f32.mrb[0].mxu0
    %294 = vmatprep.mubr.f32.mxu0 0.0
    %295 = vmatmul.mubr.f32.gmra.mrb[0].mxu0 %v126
    %v296 = vpop.f32.mrb[0].mxu0
    %v297 = vadd.f32 0.0, %v296
    %v298 = vpop.f32.mrb[0].mxu0
    %299 = vmatprep.mubr.f32.mxu0 0.0
    %300 = vmatmul.mubr.f32.gmra.mrb[0].mxu0 %v127
    %v301 = vpop.f32.mrb[0].mxu0
    %v302 = vadd.f32 0.0, %v301
    %v303 = vpop.f32.mrb[0].mxu0
    %304 = vdwg.mxu0
    %v305 = vadd.f32 %v128, %v227
    %v306 = vadd.f32 %v129, %v232
    %v307 = vadd.f32 %v130, %v237
    %v308 = vadd.f32 %v131, %v242
    %v309 = vadd.f32 %v132, %v247
    %v310 = vadd.f32 %v133, %v252
    %v311 = vadd.f32 %v134, %v257
    %v312 = vadd.f32 %v135, %v262
    %v313 = vadd.f32 %v136, %v267
    %v314 = vadd.f32 %v137, %v272
    %v315 = vadd.f32 %v138, %v277
    %v316 = vadd.f32 %v139, %v282
    %v317 = vadd.f32 %v140, %v287
    %v318 = vadd.f32 %v141, %v292
    %v319 = vadd.f32 %v142, %v297
    %v320 = vadd.f32 %v143, %v302
    %321 = vst [vmem:[#allocation2] sm:$0xff] %v305
    %322 = vst [vmem:[#allocation2 + $0x8] sm:$0xff] %v306
    %323 = vst [vmem:[#allocation2 + $0x10] sm:$0xff] %v307
    %324 = vst [vmem:[#allocation2 + $0x18] sm:$0xff] %v308
    %325 = vst [vmem:[#allocation2 + $0x20] sm:$0xff] %v309
    %326 = vst [vmem:[#allocation2 + $0x28] sm:$0xff] %v310
    %327 = vst [vmem:[#allocation2 + $0x30] sm:$0xff] %v311
    %328 = vst [vmem:[#allocation2 + $0x38] sm:$0xff] %v312
    %329 = vst [vmem:[#allocation2 + $0x40] sm:$0xff] %v313
    %330 = vst [vmem:[#allocation2 + $0x48] sm:$0xff] %v314
    %331 = vst [vmem:[#allocation2 + $0x50] sm:$0xff] %v315
    %332 = vst [vmem:[#allocation2 + $0x58] sm:$0xff] %v316
    %333 = vst [vmem:[#allocation2 + $0x60] sm:$0xff] %v317
    %334 = vst [vmem:[#allocation2 + $0x68] sm:$0xff] %v318
    %335 = vst [vmem:[#allocation2 + $0x70] sm:$0xff] %v319
    %336 = vst [vmem:[#allocation2 + $0x78] sm:$0xff] %v320
    // Predicated region
    $region42: #{tpu_custom_call.1} parent=1 // pred_check
      %p337 = pneg %p76
    $region43: #{tpu_custom_call.1} parent=1 // pred_check_branch
      %339 = sbr.rel (%p337) target = $region45
    $region44: #{tpu_custom_call.1} parent=1 // pred_region
      %v340 = vld [vmem:[#allocation8] sm:$0xff]
      %v341 = vld [vmem:[#allocation8 + $0x8] sm:$0xff]
      %v342 = vld [vmem:[#allocation8 + $0x10] sm:$0xff]
      %v343 = vld [vmem:[#allocation8 + $0x18] sm:$0xff]
      %v344 = vld [vmem:[#allocation8 + $0x20] sm:$0xff]
      %v345 = vld [vmem:[#allocation8 + $0x28] sm:$0xff]
      %v346 = vld [vmem:[#allocation8 + $0x30] sm:$0xff]
      %v347 = vld [vmem:[#allocation8 + $0x38] sm:$0xff]
      %v348 = vld [vmem:[#allocation8 + $0x40] sm:$0xff]
      %v349 = vld [vmem:[#allocation8 + $0x48] sm:$0xff]
      %v350 = vld [vmem:[#allocation8 + $0x50] sm:$0xff]
      %v351 = vld [vmem:[#allocation8 + $0x58] sm:$0xff]
      %v352 = vld [vmem:[#allocation8 + $0x60] sm:$0xff]
      %v353 = vld [vmem:[#allocation8 + $0x68] sm:$0xff]
      %v354 = vld [vmem:[#allocation8 + $0x70] sm:$0xff]
      %v355 = vld [vmem:[#allocation8 + $0x78] sm:$0xff]
      %v356 = vld [vmem:[#allocation2] sm:$0xff]
      %v357 = vld [vmem:[#allocation2 + $0x8] sm:$0xff]
      %v358 = vld [vmem:[#allocation2 + $0x10] sm:$0xff]
      %v359 = vld [vmem:[#allocation2 + $0x18] sm:$0xff]
      %v360 = vld [vmem:[#allocation2 + $0x20] sm:$0xff]
      %v361 = vld [vmem:[#allocation2 + $0x28] sm:$0xff]
      %v362 = vld [vmem:[#allocation2 + $0x30] sm:$0xff]
      %v363 = vld [vmem:[#allocation2 + $0x38] sm:$0xff]
      %v364 = vld [vmem:[#allocation2 + $0x40] sm:$0xff]
      %v365 = vld [vmem:[#allocation2 + $0x48] sm:$0xff]
      %v366 = vld [vmem:[#allocation2 + $0x50] sm:$0xff]
      %v367 = vld [vmem:[#allocation2 + $0x58] sm:$0xff]
      %v368 = vld [vmem:[#allocation2 + $0x60] sm:$0xff]
      %v369 = vld [vmem:[#allocation2 + $0x68] sm:$0xff]
      %v370 = vld [vmem:[#allocation2 + $0x70] sm:$0xff]
      %v371 = vld [vmem:[#allocation2 + $0x78] sm:$0xff]
      %v372 = vadd.f32 %v340, %v356
      %v373 = vadd.f32 %v341, %v357
      %v374 = vadd.f32 %v342, %v358
      %v375 = vadd.f32 %v343, %v359
      %v376 = vadd.f32 %v344, %v360
      %v377 = vadd.f32 %v345, %v361
      %v378 = vadd.f32 %v346, %v362
      %v379 = vadd.f32 %v347, %v363
      %v380 = vadd.f32 %v348, %v364
      %v381 = vadd.f32 %v349, %v365
      %v382 = vadd.f32 %v350, %v366
      %v383 = vadd.f32 %v351, %v367
      %v384 = vadd.f32 %v352, %v368
      %v385 = vadd.f32 %v353, %v369
      %v386 = vadd.f32 %v354, %v370
      %v387 = vadd.f32 %v355, %v371
      %v388 = vld [vmem:[#allocation9] sm:$0xff]
      %v389 = vld [vmem:[#allocation9 + $0x8] sm:$0xff]
      %v390 = vld [vmem:[#allocation9 + $0x10] sm:$0xff]
      %v391 = vld [vmem:[#allocation9 + $0x18] sm:$0xff]
      %v392 = vld [vmem:[#allocation9 + $0x20] sm:$0xff]
      %v393 = vld [vmem:[#allocation9 + $0x28] sm:$0xff]
      %v394 = vld [vmem:[#allocation9 + $0x30] sm:$0xff]
      %v395 = vld [vmem:[#allocation9 + $0x38] sm:$0xff]
      %v396 = vld [vmem:[#allocation9 + $0x40] sm:$0xff]
      %v397 = vld [vmem:[#allocation9 + $0x48] sm:$0xff]
      %v398 = vld [vmem:[#allocation9 + $0x50] sm:$0xff]
      %v399 = vld [vmem:[#allocation9 + $0x58] sm:$0xff]
      %v400 = vld [vmem:[#allocation9 + $0x60] sm:$0xff]
      %v401 = vld [vmem:[#allocation9 + $0x68] sm:$0xff]
      %v402 = vld [vmem:[#allocation9 + $0x70] sm:$0xff]
      %v403 = vld [vmem:[#allocation9 + $0x78] sm:$0xff]
      %v404 = vld [vmem:[%s4] sm:$0x1]
      %v406 = vlaneseq
      %v407 = vshrl.u32 %v406, 7
      %v408 = vsub.s32 0, %v407
      %v409 = vrot.slane %v404, %v408
      %411 = vmatprep.subr.mxu0 0.0
      %412 = vmatpush1.msra.mxu0 %v388
      %413 = vmatprep.subr.mxu0 0.0
      %414 = vmatpush1.msra.mxu0 %v389
      %415 = vmatprep.subr.mxu0 0.0
      %416 = vmatpush1.msra.mxu0 %v390
      %417 = vmatprep.subr.mxu0 0.0
      %418 = vmatpush1.msra.mxu0 %v391
      %419 = vmatprep.subr.mxu0 0.0
      %420 = vmatpush1.msra.mxu0 %v392
      %421 = vmatprep.subr.mxu0 0.0
      %422 = vmatpush1.msra.mxu0 %v393
      %423 = vmatprep.subr.mxu0 0.0
      %424 = vmatpush1.msra.mxu0 %v394
      %425 = vmatprep.subr.mxu0 0.0
      %426 = vmatpush1.msra.mxu0 %v395
      %427 = vmatprep.subr.mxu0 0.0
      %428 = vmatpush1.msra.mxu0 %v396
      %429 = vmatprep.subr.mxu0 0.0
      %430 = vmatpush1.msra.mxu0 %v397
      %431 = vmatprep.subr.mxu0 0.0
      %432 = vmatpush1.msra.mxu0 %v398
      %433 = vmatprep.subr.mxu0 0.0
      %434 = vmatpush1.msra.mxu0 %v399
      %435 = vmatprep.subr.mxu0 0.0
      %436 = vmatpush1.msra.mxu0 %v400
      %437 = vmatprep.subr.mxu0 0.0
      %438 = vmatpush1.msra.mxu0 %v401
      %439 = vmatprep.subr.mxu0 0.0
      %440 = vmatpush1.msra.mxu0 %v402
      %441 = vmatprep.subr.mxu0 0.0
      %442 = vmatpush1.msra.mxu0 %v403
      %443 = vmatprep.subr.mxu0 0.0
      %444 = vmatpush1.msra.mxu0 0.0
      %445 = vmatprep.subr.mxu0 0.0
      %446 = vmatpush1.msra.mxu0 0.0
      %447 = vmatprep.subr.mxu0 0.0
      %448 = vmatpush1.msra.mxu0 0.0
      %449 = vmatprep.subr.mxu0 0.0
      %450 = vmatpush1.msra.mxu0 0.0
      %451 = vmatprep.subr.mxu0 0.0
      %452 = vmatpush1.msra.mxu0 0.0
      %453 = vmatprep.subr.mxu0 0.0
      %454 = vmatpush1.msra.mxu0 0.0
      %455 = vmatprep.subr.mxu0 0.0
      %456 = vmatpush1.msra.mxu0 0.0
      %457 = vmatprep.subr.mxu0 0.0
      %458 = vmatpush1.msra.mxu0 0.0
      %459 = vmatprep.subr.mxu0 0.0
      %460 = vmatpush1.msra.mxu0 0.0
      %461 = vmatprep.subr.mxu0 0.0
      %462 = vmatpush1.msra.mxu0 0.0
      %463 = vmatprep.subr.mxu0 0.0
      %464 = vmatpush1.msra.mxu0 0.0
      %465 = vmatprep.subr.mxu0 0.0
      %466 = vmatpush1.msra.mxu0 0.0
      %467 = vmatprep.subr.mxu0 0.0
      %468 = vmatpush1.msra.mxu0 0.0
      %469 = vmatprep.subr.mxu0 0.0
      %470 = vmatpush1.msra.mxu0 0.0
      %471 = vmatprep.subr.mxu0 0.0
      %472 = vmatpush1.msra.mxu0 0.0
      %473 = vmatprep.subr.mxu0 0.0
      %474 = vmatpush1.msra.mxu0 0.0
      %475 = vmatprep.mubr.f32.mxu0 0.0
      %476 = vmatmul.mubr.f32.gmra.mrb[0].mxu0 %v372
      %v477 = vpop.f32.mrb[0].mxu0
      %v478 = vadd.f32 %v409, %v477
      %v479 = vpop.f32.mrb[0].mxu0
      %480 = vmatprep.mubr.f32.mxu0 0.0
      %481 = vmatmul.mubr.f32.gmra.mrb[0].mxu0 %v373
      %v482 = vpop.f32.mrb[0].mxu0
      %v483 = vadd.f32 %v409, %v482
      %v484 = vpop.f32.mrb[0].mxu0
      %485 = vmatprep.mubr.f32.mxu0 0.0
      %486 = vmatmul.mubr.f32.gmra.mrb[0].mxu0 %v374
      %v487 = vpop.f32.mrb[0].mxu0
      %v488 = vadd.f32 %v409, %v487
      %v489 = vpop.f32.mrb[0].mxu0
      %490 = vmatprep.mubr.f32.mxu0 0.0
      %491 = vmatmul.mubr.f32.gmra.mrb[0].mxu0 %v375
      %v492 = vpop.f32.mrb[0].mxu0
      %v493 = vadd.f32 %v409, %v492
      %v494 = vpop.f32.mrb[0].mxu0
      %495 = vmatprep.mubr.f32.mxu0 0.0
      %496 = vmatmul.mubr.f32.gmra.mrb[0].mxu0 %v376
      %v497 = vpop.f32.mrb[0].mxu0
      %v498 = vadd.f32 %v409, %v497
      %v499 = vpop.f32.mrb[0].mxu0
      %500 = vmatprep.mubr.f32.mxu0 0.0
      %501 = vmatmul.mubr.f32.gmra.mrb[0].mxu0 %v377
      %v502 = vpop.f32.mrb[0].mxu0
      %v503 = vadd.f32 %v409, %v502
      %v504 = vpop.f32.mrb[0].mxu0
      %505 = vmatprep.mubr.f32.mxu0 0.0
      %506 = vmatmul.mubr.f32.gmra.mrb[0].mxu0 %v378
      %v507 = vpop.f32.mrb[0].mxu0
      %v508 = vadd.f32 %v409, %v507
      %v509 = vpop.f32.mrb[0].mxu0
      %510 = vmatprep.mubr.f32.mxu0 0.0
      %511 = vmatmul.mubr.f32.gmra.mrb[0].mxu0 %v379
      %v512 = vpop.f32.mrb[0].mxu0
      %v513 = vadd.f32 %v409, %v512
      %v514 = vpop.f32.mrb[0].mxu0
      %515 = vmatprep.mubr.f32.mxu0 0.0
      %516 = vmatmul.mubr.f32.gmra.mrb[0].mxu0 %v380
      %v517 = vpop.f32.mrb[0].mxu0
      %v518 = vadd.f32 %v409, %v517
      %v519 = vpop.f32.mrb[0].mxu0
      %520 = vmatprep.mubr.f32.mxu0 0.0
      %521 = vmatmul.mubr.f32.gmra.mrb[0].mxu0 %v381
      %v522 = vpop.f32.mrb[0].mxu0
      %v523 = vadd.f32 %v409, %v522
      %v524 = vpop.f32.mrb[0].mxu0
      %525 = vmatprep.mubr.f32.mxu0 0.0
      %526 = vmatmul.mubr.f32.gmra.mrb[0].mxu0 %v382
      %v527 = vpop.f32.mrb[0].mxu0
      %v528 = vadd.f32 %v409, %v527
      %v529 = vpop.f32.mrb[0].mxu0
      %530 = vmatprep.mubr.f32.mxu0 0.0
      %531 = vmatmul.mubr.f32.gmra.mrb[0].mxu0 %v383
      %v532 = vpop.f32.mrb[0].mxu0
      %v533 = vadd.f32 %v409, %v532
      %v534 = vpop.f32.mrb[0].mxu0
      %535 = vmatprep.mubr.f32.mxu0 0.0
      %536 = vmatmul.mubr.f32.gmra.mrb[0].mxu0 %v384
      %v537 = vpop.f32.mrb[0].mxu0
      %v538 = vadd.f32 %v409, %v537
      %v539 = vpop.f32.mrb[0].mxu0
      %540 = vmatprep.mubr.f32.mxu0 0.0
      %541 = vmatmul.mubr.f32.gmra.mrb[0].mxu0 %v385
      %v542 = vpop.f32.mrb[0].mxu0
      %v543 = vadd.f32 %v409, %v542
      %v544 = vpop.f32.mrb[0].mxu0
      %545 = vmatprep.mubr.f32.mxu0 0.0
      %546 = vmatmul.mubr.f32.gmra.mrb[0].mxu0 %v386
      %v547 = vpop.f32.mrb[0].mxu0
      %v548 = vadd.f32 %v409, %v547
      %v549 = vpop.f32.mrb[0].mxu0
      %550 = vmatprep.mubr.f32.mxu0 0.0
      %551 = vmatmul.mubr.f32.gmra.mrb[0].mxu0 %v387
      %v552 = vpop.f32.mrb[0].mxu0
      %v553 = vadd.f32 %v409, %v552
      %v554 = vpop.f32.mrb[0].mxu0
      %555 = vdwg.mxu0
      %v556 = vmax.f32 %v478, 0.0
      %v557 = vmax.f32 %v483, 0.0
      %v558 = vmax.f32 %v488, 0.0
      %v559 = vmax.f32 %v493, 0.0
      %v560 = vmax.f32 %v498, 0.0
      %v561 = vmax.f32 %v503, 0.0
      %v562 = vmax.f32 %v508, 0.0
      %v563 = vmax.f32 %v513, 0.0
      %v564 = vmax.f32 %v518, 0.0
      %v565 = vmax.f32 %v523, 0.0
      %v566 = vmax.f32 %v528, 0.0
      %v567 = vmax.f32 %v533, 0.0
      %v568 = vmax.f32 %v538, 0.0
      %v569 = vmax.f32 %v543, 0.0
      %v570 = vmax.f32 %v548, 0.0
      %v571 = vmax.f32 %v553, 0.0
      %572 = vst [vmem:[#allocation11] sm:$0xff] %v556
      %573 = vst [vmem:[#allocation11 + $0x8] sm:$0xff] %v557
      %574 = vst [vmem:[#allocation11 + $0x10] sm:$0xff] %v558
      %575 = vst [vmem:[#allocation11 + $0x18] sm:$0xff] %v559
      %576 = vst [vmem:[#allocation11 + $0x20] sm:$0xff] %v560
      %577 = vst [vmem:[#allocation11 + $0x28] sm:$0xff] %v561
      %578 = vst [vmem:[#allocation11 + $0x30] sm:$0xff] %v562
      %579 = vst [vmem:[#allocation11 + $0x38] sm:$0xff] %v563
      %580 = vst [vmem:[#allocation11 + $0x40] sm:$0xff] %v564
      %581 = vst [vmem:[#allocation11 + $0x48] sm:$0xff] %v565
      %582 = vst [vmem:[#allocation11 + $0x50] sm:$0xff] %v566
      %583 = vst [vmem:[#allocation11 + $0x58] sm:$0xff] %v567
      %584 = vst [vmem:[#allocation11 + $0x60] sm:$0xff] %v568
      %585 = vst [vmem:[#allocation11 + $0x68] sm:$0xff] %v569
      %586 = vst [vmem:[#allocation11 + $0x70] sm:$0xff] %v570
      %587 = vst [vmem:[#allocation11 + $0x78] sm:$0xff] %v571
    $region45: #{tpu_custom_call.1} parent=1 // pred_fallthru
      _
    // Predicated region
    $region46: #{tpu_custom_call.1} parent=1 // pred_check
      _
    $region47: #{tpu_custom_call.1} parent=1 // pred_check_branch
      %589 = sbr.rel (0) target = $region49
    $region48: #{tpu_custom_call.1} parent=1 // pred_region
      %s591 = ssub.s32 2048, 2048
      %592 = vsyncadd [#allocation5], %s591
      %s593 = sshll.u32 [#allocation11], 4
      %s594 = int_to_ptr.vmem [resolvable:$true] %s593
      %599 = dma.vmem_to_hbm [thread:$0]  %s594, 2048, %s5, [#allocation5], 128, 128, 8
    $region49: #{tpu_custom_call.1} parent=1 // pred_fallthru
      _
    // Predicated region
    $region50: #{tpu_custom_call.1} parent=1 // pred_check
      _
    $region51: #{tpu_custom_call.1} parent=1 // pred_check_branch
      %601 = sbr.rel (0) target = $region53
    $region52: #{tpu_custom_call.1} parent=1 // pred_region
      %602 = dma.done [#allocation5], 2048
    $region53: #{tpu_custom_call.1} parent=1 // pred_fallthru
      _
    %603 = vsyncpa [#allocation4], 1
    %604 = vsyncpa [#allocation7], 1
    %605 = vsyncpa [#allocation10], 1
    %606 = vsyncpa [#allocation5], 1

</llo_original>
